<compile_context>
chip_gen: v6e
topology: v6e:2x2x1
jax: 0.10.0
libtpu: 0.0.40
codegen_flags: <defaults>
</compile_context>

<pallas_src>
import jax
import jax.numpy as jnp
from jax.experimental import pallas as pl
from jax.experimental.pallas import tpu as pltpu

INPUT_DIM = 2
OUTPUT_DIM = 3


def _linear_kernel(w_ref, b_ref, x_ref, o_ref):
    """w_ref: (3, 2) f32 SMEM, b_ref: (3,) f32 SMEM,
    x_ref: (TB, 2) f32 VMEM, o_ref: (TB, 3) f32 VMEM.

    y[:, o] = x[:, 0] * W[o, 0] + x[:, 1] * W[o, 1] + b[o]
    Pure VPU (scalar-broadcast FMAs); no MXU push/pop, no transpose.
    """
    x = x_ref[...]                       # (TB, 2)
    x0 = x[:, 0:1]                       # (TB, 1)
    x1 = x[:, 1:2]                       # (TB, 1)
    for o in range(OUTPUT_DIM):          # statically unrolled (3 columns)
        col = x0 * w_ref[o, 0] + x1 * w_ref[o, 1] + b_ref[o]
        o_ref[:, o:o + 1] = col.astype(o_ref.dtype)


def _choose_batch_tile(batch, tb):
    """Pick a batch tile: either the full batch, or a multiple of 8 rows."""
    tb = min(tb, batch)
    if tb == batch:
        return tb
    tb = ((tb + 7) // 8) * 8             # sublane dim must be a multiple of 8
    return min(tb, batch)


def linear_param_model(x, weight, bias, *, tb=1024):
    """x: (B, 2) f32, weight: (3, 2) f32, bias: (3,) f32 -> (B, 3) f32."""
    batch = x.shape[0]
    tb = _choose_batch_tile(batch, tb)
    grid = (pl.cdiv(batch, tb),)

    return pl.pallas_call(
        _linear_kernel,
        out_shape=jax.ShapeDtypeStruct((batch, OUTPUT_DIM), x.dtype),
        grid=grid,
        in_specs=[
            # Tiny parameters live whole in SMEM and are read as scalars.
            pl.BlockSpec(memory_space=pltpu.MemorySpace.SMEM),   # weight (3, 2)
            pl.BlockSpec(memory_space=pltpu.MemorySpace.SMEM),   # bias (3,)
            # Batch-tiled input: auto double-buffered HBM<->VMEM pipeline.
            pl.BlockSpec((tb, INPUT_DIM), lambda i: (i, 0)),
        ],
        out_specs=pl.BlockSpec((tb, OUTPUT_DIM), lambda i: (i, 0)),
        compiler_params=pltpu.CompilerParams(
            # Batch tiles are independent -> megacore sharding on v7x.
            dimension_semantics=("parallel",),
        ),
        cost_estimate=pl.CostEstimate(
            flops=12 * batch,                 # 3 outputs x (2 mul + 2 add) per row
            transcendentals=0,
            bytes_accessed=20 * batch + 36,   # 8 B in + 12 B out per row + params
        ),
    )(weight, bias, x)


if __name__ == "__main__":
    key = jax.random.PRNGKey(0)
    kx, kw, kb = jax.random.split(key, 3)

    # PyTorch nn.Linear-style init: uniform(-1/sqrt(in), 1/sqrt(in)).
    bound = 1.0 / (INPUT_DIM ** 0.5)
    weight = jax.random.uniform(kw, (OUTPUT_DIM, INPUT_DIM), jnp.float32,
                                minval=-bound, maxval=bound)
    bias = jax.random.uniform(kb, (OUTPUT_DIM,), jnp.float32,
                              minval=-bound, maxval=bound)

    # Small batch that is NOT a multiple of the tile so the masked edge block
    # is exercised: 20 rows with tb=8 -> grid of 3, last block half full.
    batch = 20
    x = jax.random.normal(kx, (batch, INPUT_DIM), jnp.float32)

    y = linear_param_model(x, weight, bias, tb=8)
    jax.block_until_ready(y)

    # Reference check against plain JAX (same math as torch.nn.Linear).
    y_ref = x @ weight.T + bias
    assert y.shape == (batch, OUTPUT_DIM)
    assert jnp.allclose(y, y_ref, atol=1e-5, rtol=1e-5)

    print("KERNEL_OK")
</pallas_src>

<mosaic_0001>
module attributes {stable_mosaic.version = 11 : i64} {
  func.func @_linear_kernel(%arg0: i32, %arg1: memref<3x2xf32, #tpu.memory_space<smem>>, %arg2: memref<3xf32, #tpu.memory_space<smem>>, %arg3: memref<8x2xf32, #tpu.memory_space<vmem>>, %arg4: memref<8x3xf32, #tpu.memory_space<vmem>>) attributes {dimension_semantics = [#tpu.dimension_semantics<parallel>], iteration_bounds = array<i64: 3>, scalar_prefetch = 0 : i64, scratch_operands = 0 : i64, tpu.core_type = #tpu.core_type<tc>, window_params = [{transform_indices = @transform_0, window_bounds = array<i64: 3, 2>}, {transform_indices = @transform_1, window_bounds = array<i64: 3>}, {transform_indices = @transform_2, window_bounds = array<i64: 8, 2>}, {transform_indices = @transform_3, window_bounds = array<i64: 8, 3>}]} {
    %c0 = arith.constant 0 : index
    %c0_0 = arith.constant 0 : index
    %0 = vector.load %arg3[%c0, %c0_0] : memref<8x2xf32, #tpu.memory_space<vmem>>, vector<8x2xf32>
    %1 = vector.extract_strided_slice %0 {offsets = [0, 0], sizes = [8, 1], strides = [1, 1]} : vector<8x2xf32> to vector<8x1xf32>
    %2 = vector.extract_strided_slice %0 {offsets = [0, 1], sizes = [8, 1], strides = [1, 1]} : vector<8x2xf32> to vector<8x1xf32>
    %c0_1 = arith.constant 0 : index
    %c0_2 = arith.constant 0 : index
    %3 = memref.load %arg1[%c0_1, %c0_2] : memref<3x2xf32, #tpu.memory_space<smem>>
    %4 = vector.broadcast %3 : f32 to vector<8x1xf32>
    %5 = arith.mulf %1, %4 : vector<8x1xf32>
    %c0_3 = arith.constant 0 : index
    %c1 = arith.constant 1 : index
    %6 = memref.load %arg1[%c0_3, %c1] : memref<3x2xf32, #tpu.memory_space<smem>>
    %7 = vector.broadcast %6 : f32 to vector<8x1xf32>
    %8 = arith.mulf %2, %7 : vector<8x1xf32>
    %9 = arith.addf %5, %8 : vector<8x1xf32>
    %c0_4 = arith.constant 0 : index
    %10 = memref.load %arg2[%c0_4] : memref<3xf32, #tpu.memory_space<smem>>
    %11 = vector.broadcast %10 : f32 to vector<8x1xf32>
    %12 = arith.addf %9, %11 : vector<8x1xf32>
    %c0_5 = arith.constant 0 : index
    %c0_6 = arith.constant 0 : index
    %13 = vector.load %arg4[%c0_5, %c0_6] : memref<8x3xf32, #tpu.memory_space<vmem>>, vector<8x1xf32>
    tpu.vector_store %arg4[%c0_5, %c0_6], %12 {strides = array<i32>} : memref<8x3xf32, #tpu.memory_space<vmem>>, vector<8x1xf32>,
    %c1_7 = arith.constant 1 : index
    %c0_8 = arith.constant 0 : index
    %14 = memref.load %arg1[%c1_7, %c0_8] : memref<3x2xf32, #tpu.memory_space<smem>>
    %15 = vector.broadcast %14 : f32 to vector<8x1xf32>
    %16 = arith.mulf %1, %15 : vector<8x1xf32>
    %c1_9 = arith.constant 1 : index
    %c1_10 = arith.constant 1 : index
    %17 = memref.load %arg1[%c1_9, %c1_10] : memref<3x2xf32, #tpu.memory_space<smem>>
    %18 = vector.broadcast %17 : f32 to vector<8x1xf32>
    %19 = arith.mulf %2, %18 : vector<8x1xf32>
    %20 = arith.addf %16, %19 : vector<8x1xf32>
    %c1_11 = arith.constant 1 : index
    %21 = memref.load %arg2[%c1_11] : memref<3xf32, #tpu.memory_space<smem>>
    %22 = vector.broadcast %21 : f32 to vector<8x1xf32>
    %23 = arith.addf %20, %22 : vector<8x1xf32>
    %c0_12 = arith.constant 0 : index
    %c1_13 = arith.constant 1 : index
    %24 = vector.load %arg4[%c0_12, %c1_13] : memref<8x3xf32, #tpu.memory_space<vmem>>, vector<8x1xf32>
    tpu.vector_store %arg4[%c0_12, %c1_13], %23 {strides = array<i32>} : memref<8x3xf32, #tpu.memory_space<vmem>>, vector<8x1xf32>,
    %c2 = arith.constant 2 : index
    %c0_14 = arith.constant 0 : index
    %25 = memref.load %arg1[%c2, %c0_14] : memref<3x2xf32, #tpu.memory_space<smem>>
    %26 = vector.broadcast %25 : f32 to vector<8x1xf32>
    %27 = arith.mulf %1, %26 : vector<8x1xf32>
    %c2_15 = arith.constant 2 : index
    %c1_16 = arith.constant 1 : index
    %28 = memref.load %arg1[%c2_15, %c1_16] : memref<3x2xf32, #tpu.memory_space<smem>>
    %29 = vector.broadcast %28 : f32 to vector<8x1xf32>
    %30 = arith.mulf %2, %29 : vector<8x1xf32>
    %31 = arith.addf %27, %30 : vector<8x1xf32>
    %c2_17 = arith.constant 2 : index
    %32 = memref.load %arg2[%c2_17] : memref<3xf32, #tpu.memory_space<smem>>
    %33 = vector.broadcast %32 : f32 to vector<8x1xf32>
    %34 = arith.addf %31, %33 : vector<8x1xf32>
    %c0_18 = arith.constant 0 : index
    %c2_19 = arith.constant 2 : index
    %35 = vector.load %arg4[%c0_18, %c2_19] : memref<8x3xf32, #tpu.memory_space<vmem>>, vector<8x1xf32>
    tpu.vector_store %arg4[%c0_18, %c2_19], %34 {strides = array<i32>} : memref<8x3xf32, #tpu.memory_space<vmem>>, vector<8x1xf32>,
    return
  }
  func.func @transform_0(%arg0: i32) -> (i32, i32) {
    %c0_i32 = arith.constant 0 : i32
    %c0_i32_0 = arith.constant 0 : i32
    %c0_i32_1 = arith.constant 0 : i32
    return %c0_i32, %c0_i32_0 : i32, i32
  }
  func.func @transform_1(%arg0: i32) -> i32 {
    %c0_i32 = arith.constant 0 : i32
    %c0_i32_0 = arith.constant 0 : i32
    return %c0_i32 : i32
  }
  func.func @transform_2(%arg0: i32) -> (i32, i32) {
    %c0_i32 = arith.constant 0 : i32
    %c0_i32_0 = arith.constant 0 : i32
    return %arg0, %c0_i32 : i32, i32
  }
  func.func @transform_3(%arg0: i32) -> (i32, i32) {
    %c0_i32 = arith.constant 0 : i32
    %c0_i32_0 = arith.constant 0 : i32
    return %arg0, %c0_i32 : i32, i32
  }
}

</mosaic_0001>

<llo_original>
// kernel: tpu_custom_call.1
$region0: #{tpu_custom_call.1}
  #allocation0 [shape = 'u32[]', space=smem, size = 0x4, offset = 0x4, fixed_abs, tag = 'smem constant byte address 0x4 - core index']
  #allocation1 [shape = 'u32[144,128]{1,0:T(1,128)}', space=vmem, size = 0x12000, scoped, tag = 'internal scratch']
  %s0 = inlined_call_operand.vmem [shape: f32[3,2], index: 0, kind: input, shape index: {}]
  %s1 = inlined_call_operand.vmem [shape: f32[3], index: 1, kind: input, shape index: {}]
  %s2 = inlined_call_operand.vmem [shape: f32[20,2], index: 2, kind: input, shape index: {}]
  %s3 = inlined_call_operand.vmem [shape: f32[20,3], index: 3, kind: output, shape index: {}]
  %s4 = sld [smem:[#allocation0]]
  $region53: #{tpu_custom_call.1} parent=0
    _
  %s6 = ssub.s32 1, %s4
  %s7 = scalar_select 0, %s6, %s4
  $region1: #{tpu_custom_call.1} parent=0
    #allocation2 [shape = 'u8[2048]{0}', space=smem, size = 0x800, scoped, tag = 'input window, operand 0, single buffered']
    #allocation3 [shape = 's32[2]{0}', space=sflag, size = 0x8, scoped, tag = 'scoped memory for tpu_custom_call.1']
    #allocation4 [shape = 'u8[512]{0}', space=smem, size = 0x200, scoped, tag = 'input window, operand 1, single buffered']
    #allocation5 [shape = 's32[1]{0}', space=sflag, size = 0x4, scoped, tag = 'scoped memory for tpu_custom_call.1']
    %8 = vsyncpa [#allocation3], 0
    %9 = vsyncpa [#allocation5], 0
    loop: start=0, step=1, limit=5
    $region2: #{tpu_custom_call.1} parent=1 // loop_pre_header
      _
    $region3: #{tpu_custom_call.1} parent=1 // loop_header
      %s11 = sphi 0, %s15
      %p12 = scmp.ge.s32.totalorder %s11, 5
      %s19 = sphi 0, %s19
      %s21 = sphi 0, %s19
      %s22 = sphi 0, %s21
      %s36 = sphi 0, %s22
      %s40 = sphi 0, %s40
      %s42 = sphi 0, %s40
      %s43 = sphi 0, %s42
      %s57 = sphi 0, %s43
      %s63 = sphi 0, %s65
      %s66 = sphi 0, %s63
      %s67 = sphi 0, %s66
      %s83 = sphi 0, %s67
      %s89 = sphi 0, %s91
      %s92 = sphi 0, %s89
      %s93 = sphi 0, %s92
      %s109 = sphi 0, %s93
    $region4: #{tpu_custom_call.1} parent=1 // loop_header_branch
      %14 = sbr.rel (%p12) target = $region8
    $region5: #{tpu_custom_call.1} parent=1 // loop_body
      %s16 = ssub.s32 %s11, 1
      %s17 = ssub.s32 %s11, 2
      %s18 = sadd.s32 %s11, 1
      %s20 = sadd.s32 %s19, 1
      %p23 = scmp.eq.s32.totalorder %s11, 2
      %p24 = scmp.ne.s32.totalorder %s19, %s21
      %p25 = scmp.eq.s32.totalorder %s11, 0
      %p26 = por %p24, %p25
      %p27 = scmp.ne.s32.totalorder %s19, %s21
      %p28 = scmp.eq.s32.totalorder %s16, 2
      %p29 = por %p27, %p28
      %p30 = scmp.ne.s32.totalorder %s21, %s22
      %p31 = scmp.eq.s32.totalorder %s16, 0
      %p32 = por %p30, %p31
      %p33 = scmp.ne.s32.totalorder %s21, %s22
      %p34 = scmp.eq.s32.totalorder %s17, 2
      %p35 = por %p33, %p34
      %p37 = scmp.ne.s32.totalorder %s22, %s36
      %p38 = scmp.eq.s32.totalorder %s17, 0
      %p39 = por %p37, %p38
      %s41 = sadd.s32 %s40, 1
      %p44 = scmp.eq.s32.totalorder %s11, 2
      %p45 = scmp.ne.s32.totalorder %s40, %s42
      %p46 = scmp.eq.s32.totalorder %s11, 0
      %p47 = por %p45, %p46
      %p48 = scmp.ne.s32.totalorder %s40, %s42
      %p49 = scmp.eq.s32.totalorder %s16, 2
      %p50 = por %p48, %p49
      %p51 = scmp.ne.s32.totalorder %s42, %s43
      %p52 = scmp.eq.s32.totalorder %s16, 0
      %p53 = por %p51, %p52
      %p54 = scmp.ne.s32.totalorder %s42, %s43
      %p55 = scmp.eq.s32.totalorder %s17, 2
      %p56 = por %p54, %p55
      %p58 = scmp.ne.s32.totalorder %s43, %s57
      %p59 = scmp.eq.s32.totalorder %s17, 0
      %p60 = por %p58, %p59
      %s61 = ssub.s32 %s11, %s18
      %p62 = scmp.eq.s32.totalorder %s61, 0
      %s64 = sadd.s32 %s63, 1
      %s65 = scalar_select %p62, %s63, %s64
      %p68 = pneg %p62
      %p69 = scmp.eq.s32.totalorder %s11, 2
      %p70 = por %p68, %p69
      %p71 = scmp.ne.s32.totalorder %s63, %s66
      %p72 = scmp.eq.s32.totalorder %s11, 0
      %p73 = por %p71, %p72
      %p74 = scmp.ne.s32.totalorder %s63, %s66
      %p75 = scmp.eq.s32.totalorder %s16, 2
      %p76 = por %p74, %p75
      %p77 = scmp.ne.s32.totalorder %s66, %s67
      %p78 = scmp.eq.s32.totalorder %s16, 0
      %p79 = por %p77, %p78
      %p80 = scmp.ne.s32.totalorder %s66, %s67
      %p81 = scmp.eq.s32.totalorder %s17, 2
      %p82 = por %p80, %p81
      %p84 = scmp.ne.s32.totalorder %s67, %s83
      %p85 = scmp.eq.s32.totalorder %s17, 0
      %p86 = por %p84, %p85
      %s87 = ssub.s32 %s11, %s18
      %p88 = scmp.eq.s32.totalorder %s87, 0
      %s90 = sadd.s32 %s89, 1
      %s91 = scalar_select %p88, %s89, %s90
      %p94 = pneg %p88
      %p95 = scmp.eq.s32.totalorder %s11, 2
      %p96 = por %p94, %p95
      %p97 = scmp.ne.s32.totalorder %s89, %s92
      %p98 = scmp.eq.s32.totalorder %s11, 0
      %p99 = por %p97, %p98
      %p100 = scmp.ne.s32.totalorder %s89, %s92
      %p101 = scmp.eq.s32.totalorder %s16, 2
      %p102 = por %p100, %p101
      %p103 = scmp.ne.s32.totalorder %s92, %s93
      %p104 = scmp.eq.s32.totalorder %s16, 0
      %p105 = por %p103, %p104
      %p106 = scmp.ne.s32.totalorder %s92, %s93
      %p107 = scmp.eq.s32.totalorder %s17, 2
      %p108 = por %p106, %p107
      %p110 = scmp.ne.s32.totalorder %s93, %s109
      %p111 = scmp.eq.s32.totalorder %s17, 0
      %p112 = por %p110, %p111
      %p113 = scmp.le.s32.totalorder 1, %s11
      %p114 = scmp.lt.s32.totalorder %s11, 4
      %p115 = pnand %p113, %p114
      %p116 = pneg %p115
      // Predicated region
      $region9: #{tpu_custom_call.1} parent=5 // pred_check
        _
      $region10: #{tpu_custom_call.1} parent=5 // pred_check_branch
        %118 = sbr.rel (%p115) target = $region12
      $region11: #{tpu_custom_call.1} parent=5 // pred_region
        %s119 = ssub.s32 %s11, 1
        // Predicated region
        $region13: #{tpu_custom_call.1} parent=11 // pred_check
          %p120 = pneg %p32
        $region14: #{tpu_custom_call.1} parent=11 // pred_check_branch
          %122 = sbr.rel (%p120) target = $region16
        $region15: #{tpu_custom_call.1} parent=11 // pred_region
          %s124 = ssub.s32 64, 64
          %125 = vsyncadd [#allocation3], %s124
          %s127 = sshll.u32 %s0, 4
          %s128 = int_to_ptr.vmem [resolvable:$true] %s127
          %130 = dma.vmem_to_smem %s128, 64, [#allocation2], [#allocation3]
        $region16: #{tpu_custom_call.1} parent=11 // pred_fallthru
          _
        // Predicated region
        $region17: #{tpu_custom_call.1} parent=11 // pred_check
          %p131 = pneg %p53
        $region18: #{tpu_custom_call.1} parent=11 // pred_check_branch
          %133 = sbr.rel (%p131) target = $region20
        $region19: #{tpu_custom_call.1} parent=11 // pred_region
          %s135 = ssub.s32 16, 16
          %136 = vsyncadd [#allocation5], %s135
          %s138 = sshll.u32 %s1, 4
          %s139 = int_to_ptr.vmem [resolvable:$true] %s138
          %141 = dma.vmem_to_smem %s139, 16, [#allocation4], [#allocation5]
        $region20: #{tpu_custom_call.1} parent=11 // pred_fallthru
          _
      $region12: #{tpu_custom_call.1} parent=5 // pred_fallthru
        _
      %p142 = scmp.lt.s32.totalorder %s11, 3
      // Predicated region
      $region21: #{tpu_custom_call.1} parent=5 // pred_check
        %p143 = pneg %p142
      $region22: #{tpu_custom_call.1} parent=5 // pred_check_branch
        %145 = sbr.rel (%p143) target = $region24
      $region23: #{tpu_custom_call.1} parent=5 // pred_region
        // Predicated region
        $region25: #{tpu_custom_call.1} parent=23 // pred_check
          %p146 = pneg %p73
        $region26: #{tpu_custom_call.1} parent=23 // pred_check_branch
          %148 = sbr.rel (%p146) target = $region28
        $region27: #{tpu_custom_call.1} parent=23 // pred_region
          %p149 = scmp.lt.s32.totalorder %s11, 2
          %s150 = scalar_select %p149, %s11, 2
          %s151 = smul.addr %s150, 8
          %s152 = scalar_lea.vmem %s2, %s151
        $region28: #{tpu_custom_call.1} parent=23 // pred_fallthru
          _
      $region24: #{tpu_custom_call.1} parent=5 // pred_fallthru
        _
      %p153 = scmp.le.s32.totalorder 1, %s11
      %p154 = scmp.lt.s32.totalorder %s11, 4
      %p155 = pnand %p153, %p154
      %p156 = pneg %p155
      // Predicated region
      $region29: #{tpu_custom_call.1} parent=5 // pred_check
        _
      $region30: #{tpu_custom_call.1} parent=5 // pred_check_branch
        %158 = sbr.rel (%p155) target = $region32
      $region31: #{tpu_custom_call.1} parent=5 // pred_region
        %s159 = ssub.s32 %s11, 1
        // Predicated region
        $region33: #{tpu_custom_call.1} parent=31 // pred_check
          %p160 = pneg %p32
        $region34: #{tpu_custom_call.1} parent=31 // pred_check_branch
          %162 = sbr.rel (%p160) target = $region36
        $region35: #{tpu_custom_call.1} parent=31 // pred_region
          %163 = dma.done [#allocation3], 64
        $region36: #{tpu_custom_call.1} parent=31 // pred_fallthru
          _
        // Predicated region
        $region37: #{tpu_custom_call.1} parent=31 // pred_check
          %p164 = pneg %p53
        $region38: #{tpu_custom_call.1} parent=31 // pred_check_branch
          %166 = sbr.rel (%p164) target = $region40
        $region39: #{tpu_custom_call.1} parent=31 // pred_region
          %167 = dma.done [#allocation5], 16
        $region40: #{tpu_custom_call.1} parent=31 // pred_fallthru
          _
        %168 = sfence
        %p169 = pneg %p32
        %p170 = pneg %p29
        %p171 = pneg %p53
        %p172 = pneg %p50
        %p173 = scmp.lt.s32.totalorder %s16, 2
        %s174 = scalar_select %p173, %s16, 2
        %s175 = smul.addr %s174, 8
        %s176 = scalar_lea.vmem %s2, %s175
        %p177 = pneg %p79
        %p178 = pneg %p76
        %p179 = pneg %p105
        %p180 = pneg %p102
        %p181 = scmp.lt.s32.totalorder %s16, 2
        %s182 = scalar_select %p181, %s16, 2
        %s183 = smul.addr %s182, 8
        %s184 = scalar_lea.vmem %s3, %s183
        %p185 = scmp.lt.s32.totalorder %s16, 2
        %s186 = scalar_select %p185, %s16, 2
        %s187 = smul.addr %s186, 8
        %s188 = scalar_lea.vmem %s2, %s187
        %p189 = scmp.lt.s32.totalorder %s16, 2
        %s190 = scalar_select %p189, %s16, 2
        %s191 = smul.addr %s190, 8
        %s192 = scalar_lea.vmem %s3, %s191
        %v193 = vld [vmem:[%s188] sm:$0xff]
        %s194 = sld [smem:[#allocation2]]
        %v195 = vstv %s194
        %v196 = vmul.f32 %v193, %v195
        %s197 = sld [smem:[#allocation2 + $0x1]]
        %v198 = vstv %s197
        %v199 = vmul.f32 %v193, %v198
        %201 = vrot.lane.b32.xlu0 %v199, 127
        %v202 = vpop.permute.xlu0 %201
        %v204 = vadd.f32 %v196, %v202
        %s205 = sld [smem:[#allocation4]]
        %v206 = vstv %s205
        %v207 = vadd.f32 %v204, %v206
        %vm208 = vcmask 7168
        %209 = vst.msk [vmem:[%s192] sm:$0xff] %vm208, %v207
        %s210 = sld [smem:[#allocation2 + $0x80]]
        %v211 = vstv %s210
        %v212 = vmul.f32 %v193, %v211
        %s213 = sld [smem:[#allocation2 + $0x81]]
        %v214 = vstv %s213
        %v215 = vmul.f32 %v193, %v214
        %217 = vrot.lane.b32.xlu0 %v215, 127
        %v218 = vpop.permute.xlu0 %217
        %v220 = vadd.f32 %v212, %v218
        %s221 = sld [smem:[#allocation4 + $0x1]]
        %v222 = vstv %s221
        %v223 = vadd.f32 %v220, %v222
        %225 = vrot.lane.b32.xlu0 %v223, 1
        %v226 = vpop.permute.xlu0 %225
        %vm228 = vcmask 15368
        %229 = vst.msk [vmem:[%s192] sm:$0xff] %vm228, %v226
        %s230 = sld [smem:[#allocation2 + $0x100]]
        %v231 = vstv %s230
        %v232 = vmul.f32 %v193, %v231
        %s233 = sld [smem:[#allocation2 + $0x101]]
        %v234 = vstv %s233
        %v235 = vmul.f32 %v193, %v234
        %237 = vrot.lane.b32.xlu0 %v235, 127
        %v238 = vpop.permute.xlu0 %237
        %v240 = vadd.f32 %v232, %v238
        %s241 = sld [smem:[#allocation4 + $0x2]]
        %v242 = vstv %s241
        %v243 = vadd.f32 %v240, %v242
        %245 = vrot.lane.b32.xlu0 %v243, 2
        %v246 = vpop.permute.xlu0 %245
        %vm248 = vcmask 23568
        %249 = vst.msk [vmem:[%s192] sm:$0xff] %vm248, %v246
        %p250 = scmp.lt.s32.totalorder %s16, 2
        %s251 = scalar_select %p250, %s16, 2
        %s252 = smul.addr %s251, 8
        %s253 = scalar_lea.vmem %s3, %s252
        // Predicated region
        $region41: #{tpu_custom_call.1} parent=31 // pred_check
          %p254 = pneg %p102
        $region42: #{tpu_custom_call.1} parent=31 // pred_check_branch
          %256 = sbr.rel (%p254) target = $region44
        $region43: #{tpu_custom_call.1} parent=31 // pred_region
          _
        $region44: #{tpu_custom_call.1} parent=31 // pred_fallthru
          _
      $region32: #{tpu_custom_call.1} parent=5 // pred_fallthru
        _
      %p257 = scmp.le.s32.totalorder 2, %s11
      // Predicated region
      $region45: #{tpu_custom_call.1} parent=5 // pred_check
        %p258 = pneg %p257
      $region46: #{tpu_custom_call.1} parent=5 // pred_check_branch
        %260 = sbr.rel (%p258) target = $region48
      $region47: #{tpu_custom_call.1} parent=5 // pred_region
        %s261 = ssub.s32 %s11, 2
        // Predicated region
        $region49: #{tpu_custom_call.1} parent=47 // pred_check
          %p262 = pneg %p108
        $region50: #{tpu_custom_call.1} parent=47 // pred_check_branch
          %264 = sbr.rel (%p262) target = $region52
        $region51: #{tpu_custom_call.1} parent=47 // pred_region
          %p265 = scmp.lt.s32.totalorder %s17, 2
          %s266 = scalar_select %p265, %s17, 2
          %s267 = smul.addr %s266, 8
          %s268 = scalar_lea.vmem %s3, %s267
        $region52: #{tpu_custom_call.1} parent=47 // pred_fallthru
          _
      $region48: #{tpu_custom_call.1} parent=5 // pred_fallthru
        _
    $region6: #{tpu_custom_call.1} parent=1 // loop_footer
      %s15 = sadd.s32 1, %s11
    $region7: #{tpu_custom_call.1} parent=1 // loop_footer_branch
      %10 = sbr.rel target = $region3
    $region8: #{tpu_custom_call.1} parent=1 // loop_exit
      _
    %269 = vsyncpa [#allocation3], 1
    %s270 = scalar_lea.sflag [#allocation3], 1
    %271 = vsyncpa %s270, 1
    %272 = vsyncpa [#allocation5], 1

</llo_original>
